<compile_context>
chip_gen: v7x
topology: tpu7x:2x2x1
jax: 0.10.0
libtpu: 0.0.40
codegen_flags: <defaults>
</compile_context>

<pallas_src>
import functools

import jax
import jax.numpy as jnp
from jax.experimental import pallas as pl
from jax.experimental.pallas import tpu as pltpu


KERNEL_SIZES = (2, 3, 4)
KMAX = max(KERNEL_SIZES)     # 4 -> im2col window width, 4*D = 128 for D = 32
TILE_B = 8                   # batch rows per grid step (sublane-aligned)
NP = 128                     # padded FC output width (lane-dense store)


# ----------------------------------------------------------------------------
# Fused kernel: im2col conv (all branches) + mask + max-pool + bias/ReLU + FC.
# ----------------------------------------------------------------------------
def _textcnn_kernel(win_ref, wpack_ref, mask_ref, bcat_ref, fcw_ref, fcb_ref,
                    out_ref):
    """win_ref  : (TILE_B*T, 4*D)  bf16  im2col windows for this batch tile
       wpack_ref: (4*D, 3*C)       bf16  packed conv weights (zero-pad k=2,3)
       mask_ref : (T, 3*C)         f32   0 / -1e30 validity mask per branch
       bcat_ref : (1, 3*C)         f32   conv biases, grouped [k][C]
       fcw_ref  : (3*C, NP)        f32   fc weight (transposed, zero-padded)
       fcb_ref  : (1, NP)          f32   fc bias (zero-padded)
       out_ref  : (TILE_B, NP)     f32   padded logits
    """
    M, _ = win_ref.shape
    T, C3 = mask_ref.shape
    TB = M // T

    # One MXU matmul covers every conv branch, every shift, every batch row.
    conv = jnp.dot(win_ref[...], wpack_ref[...],
                   preferred_element_type=jnp.float32)        # (TB*T, 3C) f32

    # Mask out time positions past each branch's valid range, then max-pool.
    conv = conv.reshape(TB, T, C3) + mask_ref[...]            # bcast over batch
    pooled = jnp.max(conv, axis=1)                            # (TB, 3C)

    # Bias + ReLU after the pool (ReLU monotone, bias constant over t).
    feats = jnp.maximum(pooled + bcat_ref[...], 0.0)          # (TB, 3C)

    # Dropout (eval mode) is identity.  FC head, lane-dense padded store.
    out_ref[...] = (
        jnp.dot(feats, fcw_ref[...], preferred_element_type=jnp.float32)
        + fcb_ref[...]
    ).astype(out_ref.dtype)


# ----------------------------------------------------------------------------
# Parameter construction (PyTorch layouts) and one-time layout preparation.
# ----------------------------------------------------------------------------
def init_params(key, input_size, hidden_size, num_classes):
    """Parameters in PyTorch layouts: Conv2d (C,1,k,D)/(C,), Linear (cls,3C)/(cls,)."""
    C = hidden_size
    keys = jax.random.split(key, 8)
    ki = iter(keys)

    def u(shape, fan_in):
        bound = 1.0 / (fan_in ** 0.5)
        return jax.random.uniform(next(ki), shape, jnp.float32, -bound, bound)

    params = {}
    for k in KERNEL_SIZES:
        fan = 1 * k * input_size
        params[f"conv{k}_w"] = u((C, 1, k, input_size), fan)
        params[f"conv{k}_b"] = u((C,), fan)
    fan = len(KERNEL_SIZES) * C
    params["fc_w"] = u((num_classes, fan), fan)
    params["fc_b"] = u((num_classes,), fan)
    return params


def prepare_params(params):
    """Pre-pack weights once into the kernel's layouts (im2col + padded FC)."""
    C, _, _, D = params["conv2_w"].shape
    ncls = params["fc_w"].shape[0]

    # Packed conv weights: rows [dk*D:(dk+1)*D] hold W_k[dk].T, zero for dk>=k.
    blocks = []
    for k in KERNEL_SIZES:
        w = params[f"conv{k}_w"][:, 0]                     # (C, k, D)
        blk = jnp.zeros((KMAX * D, C), jnp.float32)
        for dk in range(k):
            blk = blk.at[dk * D:(dk + 1) * D, :].set(jnp.transpose(w[:, dk, :]))
        blocks.append(blk)
    wpack = jnp.concatenate(blocks, axis=1).astype(jnp.bfloat16)   # (4D, 3C)

    bcat = jnp.concatenate(
        [params[f"conv{k}_b"] for k in KERNEL_SIZES]).reshape(1, -1)  # (1, 3C)

    # FC head padded to NP lanes for an unmasked, lane-dense store.
    fcw_pad = jnp.zeros((wpack.shape[1], NP), jnp.float32)
    fcw_pad = fcw_pad.at[:, :ncls].set(jnp.transpose(params["fc_w"]))
    fcb_pad = jnp.zeros((1, NP), jnp.float32).at[:, :ncls].set(
        params["fc_b"].reshape(1, -1))

    return {"wpack": wpack, "bcat": bcat.astype(jnp.float32),
            "fcw_pad": fcw_pad, "fcb_pad": fcb_pad}


@functools.partial(jax.jit, static_argnames=("num_classes",))
def textcnn_forward(x, prepped, *, num_classes):
    """x: (B, T, D) batch-first input; returns (B, num_classes) logits."""
    B, T, D = x.shape
    C3 = prepped["bcat"].shape[-1]
    C = C3 // len(KERNEL_SIZES)
    KD = KMAX * D

    # ---- im2col (layout plumbing only): zero-pad time, concat 4 shifts. ----
    x_pad = jnp.pad(x.astype(jnp.float32), ((0, 0), (0, KMAX - 1), (0, 0)))
    win = jnp.concatenate([x_pad[:, dk:dk + T, :] for dk in range(KMAX)],
                          axis=-1).astype(jnp.bfloat16)        # (B, T, 4*D)

    # Pad batch to a multiple of TILE_B and flatten to MXU-friendly 2-D rows.
    B_pad = ((B + TILE_B - 1) // TILE_B) * TILE_B
    if B_pad != B:
        win = jnp.pad(win, ((0, B_pad - B), (0, 0), (0, 0)))
    win2d = win.reshape(B_pad * T, KD)                          # (B_pad*T, 128)

    # Additive validity mask: branch k only has outputs for t <= T - k.
    t_idx = jnp.arange(T, dtype=jnp.int32)[:, None]             # (T, 1)
    limits = jnp.repeat(
        jnp.array([T - k for k in KERNEL_SIZES], jnp.int32), C)[None, :]
    mask = jnp.where(t_idx <= limits, 0.0, -1e30).astype(jnp.float32)  # (T, 3C)

    grid = (B_pad // TILE_B,)
    flops = 2 * B_pad * T * KD * C3 + 2 * B_pad * C3 * NP
    bytes_accessed = (win2d.size * 2 + prepped["wpack"].size * 2
                      + mask.size * 4 + prepped["bcat"].size * 4
                      + prepped["fcw_pad"].size * 4 + prepped["fcb_pad"].size * 4
                      + B_pad * NP * 4)

    out = pl.pallas_call(
        _textcnn_kernel,
        out_shape=jax.ShapeDtypeStruct((B_pad, NP), jnp.float32),
        grid_spec=pltpu.PrefetchScalarGridSpec(
            num_scalar_prefetch=0,
            grid=grid,
            in_specs=[
                pl.BlockSpec((TILE_B * T, KD), lambda i: (i, 0)),   # windows
                pl.BlockSpec((KD, C3), lambda i: (0, 0)),           # conv W
                pl.BlockSpec((T, C3), lambda i: (0, 0)),            # mask
                pl.BlockSpec((1, C3), lambda i: (0, 0)),            # conv bias
                pl.BlockSpec((C3, NP), lambda i: (0, 0)),           # fc W
                pl.BlockSpec((1, NP), lambda i: (0, 0)),            # fc bias
            ],
            out_specs=pl.BlockSpec((TILE_B, NP), lambda i: (i, 0)),
        ),
        compiler_params=pltpu.CompilerParams(
            dimension_semantics=("parallel",)),
        cost_estimate=pl.CostEstimate(flops=flops, transcendentals=0,
                                      bytes_accessed=bytes_accessed),
    )(win2d, prepped["wpack"], mask, prepped["bcat"],
      prepped["fcw_pad"], prepped["fcb_pad"])

    return out[:B, :num_classes]


# ----------------------------------------------------------------------------
# Pure-JAX reference (mirrors the PyTorch module, eval mode) for verification.
# ----------------------------------------------------------------------------
def reference_forward(x, params):
    B, T, D = x.shape
    feats = []
    for k in KERNEL_SIZES:
        w = params[f"conv{k}_w"][:, 0]                     # (C, k, D)
        bias = params[f"conv{k}_b"]
        windows = jnp.stack([x[:, t:t + k, :] for t in range(T - k + 1)],
                            axis=1)                        # (B, Tk, k, D)
        conv = jnp.einsum("btkd,ckd->btc", windows, w) + bias
        feats.append(jnp.max(jax.nn.relu(conv), axis=1))   # (B, C)
    feats = jnp.concatenate(feats, axis=-1)                # (B, 3*C)
    return feats @ params["fc_w"].T + params["fc_b"]


if __name__ == "__main__":
    INPUT_SIZE = 32      # size of each word vector
    PAD_LEN = 8          # sequence (padding) length
    HIDDEN = 128         # out_channels of each Conv2d branch
    NUM_CLASSES = 7
    BATCH = 2

    key = jax.random.PRNGKey(0)
    k_x, k_p = jax.random.split(key)
    x = jax.random.normal(k_x, (BATCH, PAD_LEN, INPUT_SIZE), jnp.float32)
    params = init_params(k_p, INPUT_SIZE, HIDDEN, NUM_CLASSES)
    prepped = prepare_params(params)

    out = textcnn_forward(x, prepped, num_classes=NUM_CLASSES)
    out = jax.block_until_ready(out)
    assert out.shape == (BATCH, NUM_CLASSES), out.shape

    ref = reference_forward(x, params)
    max_err = float(jnp.max(jnp.abs(out - ref)))
    # bf16 MXU operands with f32 accumulation -> slightly looser tolerance.
    assert jnp.allclose(out, ref, atol=3e-2, rtol=3e-2), max_err
    print("KERNEL_OK")
</pallas_src>

<mosaic_0001>
module attributes {stable_mosaic.version = 11 : i64} {
  func.func @_textcnn_kernel(%arg0: i32, %arg1: memref<64x128xbf16, #tpu.memory_space<vmem>>, %arg2: memref<128x384xbf16, #tpu.memory_space<vmem>>, %arg3: memref<8x384xf32, #tpu.memory_space<vmem>>, %arg4: memref<1x384xf32, #tpu.memory_space<vmem>>, %arg5: memref<384x128xf32, #tpu.memory_space<vmem>>, %arg6: memref<1x128xf32, #tpu.memory_space<vmem>>, %arg7: memref<8x128xf32, #tpu.memory_space<vmem>>) attributes {dimension_semantics = [#tpu.dimension_semantics<parallel>], iteration_bounds = array<i64: 1>, scalar_prefetch = 0 : i64, scratch_operands = 0 : i64, tpu.core_type = #tpu.core_type<tc>, window_params = [{transform_indices = @transform_0, window_bounds = array<i64: 64, 128>}, {pipeline_mode = #tpu.pipeline_mode<synchronous>, transform_indices = @transform_1, window_bounds = array<i64: 128, 384>}, {pipeline_mode = #tpu.pipeline_mode<synchronous>, transform_indices = @transform_2, window_bounds = array<i64: 8, 384>}, {pipeline_mode = #tpu.pipeline_mode<synchronous>, transform_indices = @transform_3, window_bounds = array<i64: 1, 384>}, {pipeline_mode = #tpu.pipeline_mode<synchronous>, transform_indices = @transform_4, window_bounds = array<i64: 384, 128>}, {pipeline_mode = #tpu.pipeline_mode<synchronous>, transform_indices = @transform_5, window_bounds = array<i64: 1, 128>}, {transform_indices = @transform_6, window_bounds = array<i64: 8, 128>}]} {
    %c0 = arith.constant 0 : index
    %c0_0 = arith.constant 0 : index
    %0 = vector.load %arg1[%c0, %c0_0] : memref<64x128xbf16, #tpu.memory_space<vmem>>, vector<64x128xbf16>
    %c0_1 = arith.constant 0 : index
    %c0_2 = arith.constant 0 : index
    %1 = vector.load %arg2[%c0_1, %c0_2] : memref<128x384xbf16, #tpu.memory_space<vmem>>, vector<128x384xbf16>
    %cst = arith.constant dense<0.000000e+00> : vector<64x384xf32>
    %2 = tpu.matmul %0, %1, %cst {dimension_numbers = #tpu.dot_dimension_numbers<[1], [0], [0], [1], [0, 0, 1, 1], [], []>} : vector<64x128xbf16>, vector<128x384xbf16>, vector<64x384xf32> -> vector<64x384xf32>
    %3 = vector.shape_cast %2 : vector<64x384xf32> to vector<8x8x384xf32>
    %c0_3 = arith.constant 0 : index
    %c0_4 = arith.constant 0 : index
    %4 = vector.load %arg3[%c0_3, %c0_4] : memref<8x384xf32, #tpu.memory_space<vmem>>, vector<8x384xf32>
    %5 = vector.shape_cast %4 : vector<8x384xf32> to vector<1x8x384xf32>
    %6 = vector.broadcast %5 : vector<1x8x384xf32> to vector<8x8x384xf32>
    %7 = arith.addf %3, %6 : vector<8x8x384xf32>
    %cst_5 = arith.constant dense<0xFF800000> : vector<8x384xf32>
    %8 = vector.multi_reduction <maximumf>, %7, %cst_5 [1] : vector<8x8x384xf32> to vector<8x384xf32>
    %c0_6 = arith.constant 0 : index
    %c0_7 = arith.constant 0 : index
    %9 = vector.load %arg4[%c0_6, %c0_7] : memref<1x384xf32, #tpu.memory_space<vmem>>, vector<1x384xf32>
    %10 = vector.broadcast %9 : vector<1x384xf32> to vector<8x384xf32>
    %11 = arith.addf %8, %10 : vector<8x384xf32>
    %cst_8 = arith.constant 0.000000e+00 : f32
    %12 = vector.broadcast %cst_8 : f32 to vector<8x384xf32>
    %13 = arith.maximumf %11, %12 : vector<8x384xf32>
    %c0_9 = arith.constant 0 : index
    %c0_10 = arith.constant 0 : index
    %14 = vector.load %arg5[%c0_9, %c0_10] : memref<384x128xf32, #tpu.memory_space<vmem>>, vector<384x128xf32>
    %cst_11 = arith.constant dense<0.000000e+00> : vector<8x128xf32>
    %15 = tpu.matmul %13, %14, %cst_11 {dimension_numbers = #tpu.dot_dimension_numbers<[1], [0], [0], [1], [0, 0, 1, 1], [], []>} : vector<8x384xf32>, vector<384x128xf32>, vector<8x128xf32> -> vector<8x128xf32>
    %c0_12 = arith.constant 0 : index
    %c0_13 = arith.constant 0 : index
    %16 = vector.load %arg6[%c0_12, %c0_13] : memref<1x128xf32, #tpu.memory_space<vmem>>, vector<1x128xf32>
    %17 = vector.broadcast %16 : vector<1x128xf32> to vector<8x128xf32>
    %18 = arith.addf %15, %17 : vector<8x128xf32>
    %c0_14 = arith.constant 0 : index
    %c0_15 = arith.constant 0 : index
    %19 = vector.load %arg7[%c0_14, %c0_15] : memref<8x128xf32, #tpu.memory_space<vmem>>, vector<8x128xf32>
    tpu.vector_store %arg7[%c0_14, %c0_15], %18 {strides = array<i32>} : memref<8x128xf32, #tpu.memory_space<vmem>>, vector<8x128xf32>,
    return
  }
  func.func @transform_0(%arg0: i32) -> (i32, i32) {
    %c0_i32 = arith.constant 0 : i32
    %c0_i32_0 = arith.constant 0 : i32
    return %arg0, %c0_i32 : i32, i32
  }
  func.func @transform_1(%arg0: i32) -> (i32, i32) {
    %c0_i32 = arith.constant 0 : i32
    %c0_i32_0 = arith.constant 0 : i32
    %c0_i32_1 = arith.constant 0 : i32
    return %c0_i32, %c0_i32_0 : i32, i32
  }
  func.func @transform_2(%arg0: i32) -> (i32, i32) {
    %c0_i32 = arith.constant 0 : i32
    %c0_i32_0 = arith.constant 0 : i32
    %c0_i32_1 = arith.constant 0 : i32
    return %c0_i32, %c0_i32_0 : i32, i32
  }
  func.func @transform_3(%arg0: i32) -> (i32, i32) {
    %c0_i32 = arith.constant 0 : i32
    %c0_i32_0 = arith.constant 0 : i32
    %c0_i32_1 = arith.constant 0 : i32
    return %c0_i32, %c0_i32_0 : i32, i32
  }
  func.func @transform_4(%arg0: i32) -> (i32, i32) {
    %c0_i32 = arith.constant 0 : i32
    %c0_i32_0 = arith.constant 0 : i32
    %c0_i32_1 = arith.constant 0 : i32
    return %c0_i32, %c0_i32_0 : i32, i32
  }
  func.func @transform_5(%arg0: i32) -> (i32, i32) {
    %c0_i32 = arith.constant 0 : i32
    %c0_i32_0 = arith.constant 0 : i32
    %c0_i32_1 = arith.constant 0 : i32
    return %c0_i32, %c0_i32_0 : i32, i32
  }
  func.func @transform_6(%arg0: i32) -> (i32, i32) {
    %c0_i32 = arith.constant 0 : i32
    %c0_i32_0 = arith.constant 0 : i32
    return %arg0, %c0_i32 : i32, i32
  }
}

</mosaic_0001>

<llo_original>
// kernel: textcnn_forward.1
$region0: #{textcnn_forward.1}
  #allocation0 [shape = 'u32[]', space=smem, size = 0x4, offset = 0x4, fixed_abs, tag = 'smem constant byte address 0x4 - core index']
  #allocation1 [shape = 'u32[144,128]{1,0:T(1,128)}', space=vmem, size = 0x12000, scoped, tag = 'internal scratch']
  %s0 = inlined_call_operand.vmem [shape: bf16[64,128], index: 0, kind: input, shape index: {}]
  %s1 = inlined_call_operand.vmem [shape: bf16[128,384], index: 1, kind: input, shape index: {}]
  %s2 = inlined_call_operand.vmem [shape: f32[8,384], index: 2, kind: input, shape index: {}]
  %s3 = inlined_call_operand.vmem [shape: f32[1,384], index: 3, kind: input, shape index: {}]
  %s4 = inlined_call_operand.hbm [shape: f32[384,128], index: 4, kind: input, shape index: {}]
  %s5 = inlined_call_operand.vmem [shape: f32[1,128], index: 5, kind: input, shape index: {}]
  %s6 = inlined_call_operand.vmem [shape: f32[8,128], index: 6, kind: output, shape index: {}]
  %s7 = sld [smem:[#allocation0]]
  $region38: #{textcnn_forward.1} parent=0
    _
  %s9 = ssub.s32 1, %s7
  %s10 = scalar_select 0, %s9, %s7
  $region1: #{textcnn_forward.1} parent=0
    #allocation2 [shape = 'u8[196608]{0}', space=vmem, size = 0x30000, scoped, tag = 'input window, operand 4, single buffered']
    #allocation3 [shape = 's32[1]{0}', space=sflag, size = 0x4, scoped, tag = 'scoped memory for textcnn_forward.1']
    %11 = vsyncpa [#allocation3], 0
    // Predicated region
    $region2: #{textcnn_forward.1} parent=1 // pred_check
      _
    $region3: #{textcnn_forward.1} parent=1 // pred_check_branch
      %13 = sbr.rel (0) target = $region5
    $region4: #{textcnn_forward.1} parent=1 // pred_region
      _
    $region5: #{textcnn_forward.1} parent=1 // pred_fallthru
      _
    // Predicated region
    $region6: #{textcnn_forward.1} parent=1 // pred_check
      _
    $region7: #{textcnn_forward.1} parent=1 // pred_check_branch
      %15 = sbr.rel (0) target = $region9
    $region8: #{textcnn_forward.1} parent=1 // pred_region
      _
    $region9: #{textcnn_forward.1} parent=1 // pred_fallthru
      _
    // Predicated region
    $region10: #{textcnn_forward.1} parent=1 // pred_check
      _
    $region11: #{textcnn_forward.1} parent=1 // pred_check_branch
      %17 = sbr.rel (0) target = $region13
    $region12: #{textcnn_forward.1} parent=1 // pred_region
      _
    $region13: #{textcnn_forward.1} parent=1 // pred_fallthru
      _
    // Predicated region
    $region14: #{textcnn_forward.1} parent=1 // pred_check
      _
    $region15: #{textcnn_forward.1} parent=1 // pred_check_branch
      %19 = sbr.rel (0) target = $region17
    $region16: #{textcnn_forward.1} parent=1 // pred_region
      _
    $region17: #{textcnn_forward.1} parent=1 // pred_fallthru
      _
    // Predicated region
    $region18: #{textcnn_forward.1} parent=1 // pred_check
      _
    $region19: #{textcnn_forward.1} parent=1 // pred_check_branch
      %21 = sbr.rel (0) target = $region21
    $region20: #{textcnn_forward.1} parent=1 // pred_region
      %s23 = ssub.s32 6144, 6144
      %24 = vsyncadd [#allocation3], %s23
      %s25 = sshll.u32 [#allocation2], 4
      %s26 = int_to_ptr.vmem [resolvable:$true] %s25
      %31 = dma.hbm_to_vmem [thread:$0]  %s4, 6144, %s26, [#allocation3], 128, 128, 8
    $region21: #{textcnn_forward.1} parent=1 // pred_fallthru
      _
    // Predicated region
    $region22: #{textcnn_forward.1} parent=1 // pred_check
      _
    $region23: #{textcnn_forward.1} parent=1 // pred_check_branch
      %33 = sbr.rel (0) target = $region25
    $region24: #{textcnn_forward.1} parent=1 // pred_region
      _
    $region25: #{textcnn_forward.1} parent=1 // pred_fallthru
      _
    // Predicated region
    $region26: #{textcnn_forward.1} parent=1 // pred_check
      _
    $region27: #{textcnn_forward.1} parent=1 // pred_check_branch
      %35 = sbr.rel (0) target = $region29
    $region28: #{textcnn_forward.1} parent=1 // pred_region
      %36 = dma.done [#allocation3], 6144
    $region29: #{textcnn_forward.1} parent=1 // pred_fallthru
      _
    %v38 = vld [vmem:[%s0] sm:$0xf]
    %v39 = vld [vmem:[%s0 + $0x4] sm:$0xf]
    %v40 = vld [vmem:[%s0 + $0x8] sm:$0xf]
    %v41 = vld [vmem:[%s0 + $0xc] sm:$0xf]
    %v42 = vld [vmem:[%s0 + $0x10] sm:$0xf]
    %v43 = vld [vmem:[%s0 + $0x14] sm:$0xf]
    %v44 = vld [vmem:[%s0 + $0x18] sm:$0xf]
    %v45 = vld [vmem:[%s0 + $0x1c] sm:$0xf]
    %v46 = vld [vmem:[%s1] sm:$0xff]
    %v47 = vld [vmem:[%s1 + $0x8] sm:$0xf]
    %v48 = vld [vmem:[%s1 + $0xc] sm:$0xff]
    %v49 = vld [vmem:[%s1 + $0x14] sm:$0xf]
    %v50 = vld [vmem:[%s1 + $0x18] sm:$0xff]
    %v51 = vld [vmem:[%s1 + $0x20] sm:$0xf]
    %v52 = vld [vmem:[%s1 + $0x24] sm:$0xff]
    %v53 = vld [vmem:[%s1 + $0x2c] sm:$0xf]
    %v54 = vld [vmem:[%s1 + $0x30] sm:$0xff]
    %v55 = vld [vmem:[%s1 + $0x38] sm:$0xf]
    %v56 = vld [vmem:[%s1 + $0x3c] sm:$0xff]
    %v57 = vld [vmem:[%s1 + $0x44] sm:$0xf]
    %v58 = vld [vmem:[%s1 + $0x48] sm:$0xff]
    %v59 = vld [vmem:[%s1 + $0x50] sm:$0xf]
    %v60 = vld [vmem:[%s1 + $0x54] sm:$0xff]
    %v61 = vld [vmem:[%s1 + $0x5c] sm:$0xf]
    %v62 = vld [vmem:[%s1 + $0x60] sm:$0xff]
    %v63 = vld [vmem:[%s1 + $0x68] sm:$0xf]
    %v64 = vld [vmem:[%s1 + $0x6c] sm:$0xff]
    %v65 = vld [vmem:[%s1 + $0x74] sm:$0xf]
    %v66 = vld [vmem:[%s1 + $0x78] sm:$0xff]
    %v67 = vld [vmem:[%s1 + $0x80] sm:$0xf]
    %v68 = vld [vmem:[%s1 + $0x84] sm:$0xff]
    %v69 = vld [vmem:[%s1 + $0x8c] sm:$0xf]
    %v70 = vld [vmem:[%s1 + $0x90] sm:$0xff]
    %v71 = vld [vmem:[%s1 + $0x98] sm:$0xf]
    %v72 = vld [vmem:[%s1 + $0x9c] sm:$0xff]
    %v73 = vld [vmem:[%s1 + $0xa4] sm:$0xf]
    %v74 = vld [vmem:[%s1 + $0xa8] sm:$0xff]
    %v75 = vld [vmem:[%s1 + $0xb0] sm:$0xf]
    %v76 = vld [vmem:[%s1 + $0xb4] sm:$0xff]
    %v77 = vld [vmem:[%s1 + $0xbc] sm:$0xf]
    %v86 = vunpack.c.l.b16 %v38
    %v87 = vunpack.c.l.b16 %v39
    %v88 = vunpack.c.l.b16 %v40
    %v89 = vunpack.c.l.b16 %v41
    %v90 = vunpack.c.l.b16 %v42
    %v91 = vunpack.c.l.b16 %v43
    %v92 = vunpack.c.l.b16 %v44
    %v93 = vunpack.c.l.b16 %v45
    %v94 = vpack.c.b16 %v87, %v86
    %v95 = vpack.c.b16 %v89, %v88
    %v96 = vpack.c.b16 %v91, %v90
    %v97 = vpack.c.b16 %v93, %v92
    %v134 = vunpack.c.l.b16 %v46
    %v135 = vunpack.c.h.b16 %v46
    %v136 = vunpack.c.l.b16 %v47
    %v137 = vunpack.c.l.b16 %v48
    %v138 = vunpack.c.h.b16 %v48
    %v139 = vunpack.c.l.b16 %v49
    %v140 = vunpack.c.l.b16 %v50
    %v141 = vunpack.c.h.b16 %v50
    %v142 = vunpack.c.l.b16 %v51
    %v143 = vunpack.c.l.b16 %v52
    %v144 = vunpack.c.h.b16 %v52
    %v145 = vunpack.c.l.b16 %v53
    %v146 = vunpack.c.l.b16 %v54
    %v147 = vunpack.c.h.b16 %v54
    %v148 = vunpack.c.l.b16 %v55
    %v149 = vunpack.c.l.b16 %v56
    %v150 = vunpack.c.h.b16 %v56
    %v151 = vunpack.c.l.b16 %v57
    %v152 = vunpack.c.l.b16 %v58
    %v153 = vunpack.c.h.b16 %v58
    %v154 = vunpack.c.l.b16 %v59
    %v155 = vunpack.c.l.b16 %v60
    %v156 = vunpack.c.h.b16 %v60
    %v157 = vunpack.c.l.b16 %v61
    %v158 = vunpack.c.l.b16 %v62
    %v159 = vunpack.c.h.b16 %v62
    %v160 = vunpack.c.l.b16 %v63
    %v161 = vunpack.c.l.b16 %v64
    %v162 = vunpack.c.h.b16 %v64
    %v163 = vunpack.c.l.b16 %v65
    %v164 = vunpack.c.l.b16 %v66
    %v165 = vunpack.c.h.b16 %v66
    %v166 = vunpack.c.l.b16 %v67
    %v167 = vunpack.c.l.b16 %v68
    %v168 = vunpack.c.h.b16 %v68
    %v169 = vunpack.c.l.b16 %v69
    %v170 = vunpack.c.l.b16 %v70
    %v171 = vunpack.c.h.b16 %v70
    %v172 = vunpack.c.l.b16 %v71
    %v173 = vunpack.c.l.b16 %v72
    %v174 = vunpack.c.h.b16 %v72
    %v175 = vunpack.c.l.b16 %v73
    %v176 = vunpack.c.l.b16 %v74
    %v177 = vunpack.c.h.b16 %v74
    %v178 = vunpack.c.l.b16 %v75
    %v179 = vunpack.c.l.b16 %v76
    %v180 = vunpack.c.h.b16 %v76
    %v181 = vunpack.c.l.b16 %v77
    %v182 = vpack.c.b16 %v137, %v134
    %v183 = vpack.c.b16 %v138, %v135
    %v184 = vpack.c.b16 %v139, %v136
    %v185 = vpack.c.b16 %v143, %v140
    %v186 = vpack.c.b16 %v144, %v141
    %v187 = vpack.c.b16 %v145, %v142
    %v188 = vpack.c.b16 %v149, %v146
    %v189 = vpack.c.b16 %v150, %v147
    %v190 = vpack.c.b16 %v151, %v148
    %v191 = vpack.c.b16 %v155, %v152
    %v192 = vpack.c.b16 %v156, %v153
    %v193 = vpack.c.b16 %v157, %v154
    %v194 = vpack.c.b16 %v161, %v158
    %v195 = vpack.c.b16 %v162, %v159
    %v196 = vpack.c.b16 %v163, %v160
    %v197 = vpack.c.b16 %v167, %v164
    %v198 = vpack.c.b16 %v168, %v165
    %v199 = vpack.c.b16 %v169, %v166
    %v200 = vpack.c.b16 %v173, %v170
    %v201 = vpack.c.b16 %v174, %v171
    %v202 = vpack.c.b16 %v175, %v172
    %v203 = vpack.c.b16 %v179, %v176
    %v204 = vpack.c.b16 %v180, %v177
    %v205 = vpack.c.b16 %v181, %v178
    %230 = vmatprep.subr.bf16.mxu0 %v183
    %231 = vmatpush1.bf16.msra.mxu0 %v182
    %232 = vmatprep.subr.bf16.mxu0 %v186
    %233 = vmatpush1.bf16.msra.mxu0 %v185
    %234 = vmatprep.subr.bf16.mxu0 %v189
    %235 = vmatpush1.bf16.msra.mxu0 %v188
    %236 = vmatprep.subr.bf16.mxu0 %v192
    %237 = vmatpush1.bf16.msra.mxu0 %v191
    %238 = vmatprep.subr.bf16.mxu0 %v195
    %239 = vmatpush1.bf16.msra.mxu0 %v194
    %240 = vmatprep.subr.bf16.mxu0 %v198
    %241 = vmatpush1.bf16.msra.mxu0 %v197
    %242 = vmatprep.subr.bf16.mxu0 %v201
    %243 = vmatpush1.bf16.msra.mxu0 %v200
    %244 = vmatprep.subr.bf16.mxu0 %v204
    %245 = vmatpush1.bf16.msra.mxu0 %v203
    %246 = vmatprep.subr.bf16.mxu0 0
    %247 = vmatpush1.bf16.msra.mxu0 0
    %248 = vmatprep.subr.bf16.mxu0 0
    %249 = vmatpush1.bf16.msra.mxu0 0
    %250 = vmatprep.subr.bf16.mxu0 0
    %251 = vmatpush1.bf16.msra.mxu0 0
    %252 = vmatprep.subr.bf16.mxu0 0
    %253 = vmatpush1.bf16.msra.mxu0 0
    %254 = vmatprep.subr.bf16.mxu0 0
    %255 = vmatpush1.bf16.msra.mxu0 0
    %256 = vmatprep.subr.bf16.mxu0 0
    %257 = vmatpush1.bf16.msra.mxu0 0
    %258 = vmatprep.subr.bf16.mxu0 0
    %259 = vmatpush1.bf16.msra.mxu0 0
    %260 = vmatprep.subr.bf16.mxu0 0
    %261 = vmatpush1.bf16.msra.mxu0 0
    %262 = vmatprep.mubr.bf16.mxu0 0
    %263 = vmatmul.mubr.bf16.gmra.mrb[0].mxu0 %v94
    %v264 = vpop.f32.mrb[0].mxu0
    %v265 = vadd.f32 0.0, %v264
    %v266 = vpop.f32.mrb[0].mxu0
    %v267 = vadd.f32 0.0, %v266
    %v268 = vpop.f32.mrb[0].mxu0
    %v269 = vadd.f32 0.0, %v268
    %v270 = vpop.f32.mrb[0].mxu0
    %v271 = vadd.f32 0.0, %v270
    %272 = vmatprep.mubr.bf16.mxu0 0
    %273 = vmatmul.mubr.bf16.gmra.mrb[0].mxu0 %v95
    %v274 = vpop.f32.mrb[0].mxu0
    %v275 = vadd.f32 0.0, %v274
    %v276 = vpop.f32.mrb[0].mxu0
    %v277 = vadd.f32 0.0, %v276
    %v278 = vpop.f32.mrb[0].mxu0
    %v279 = vadd.f32 0.0, %v278
    %v280 = vpop.f32.mrb[0].mxu0
    %v281 = vadd.f32 0.0, %v280
    %282 = vmatprep.mubr.bf16.mxu0 0
    %283 = vmatmul.mubr.bf16.gmra.mrb[0].mxu0 %v96
    %v284 = vpop.f32.mrb[0].mxu0
    %v285 = vadd.f32 0.0, %v284
    %v286 = vpop.f32.mrb[0].mxu0
    %v287 = vadd.f32 0.0, %v286
    %v288 = vpop.f32.mrb[0].mxu0
    %v289 = vadd.f32 0.0, %v288
    %v290 = vpop.f32.mrb[0].mxu0
    %v291 = vadd.f32 0.0, %v290
    %292 = vmatprep.mubr.bf16.mxu0 0
    %293 = vmatmul.mubr.bf16.gmra.mrb[0].mxu0 %v97
    %v294 = vpop.f32.mrb[0].mxu0
    %v295 = vadd.f32 0.0, %v294
    %v296 = vpop.f32.mrb[0].mxu0
    %v297 = vadd.f32 0.0, %v296
    %v298 = vpop.f32.mrb[0].mxu0
    %v299 = vadd.f32 0.0, %v298
    %v300 = vpop.f32.mrb[0].mxu0
    %v301 = vadd.f32 0.0, %v300
    %302 = vdwg.mxu0
    %303 = vmatprep.subr.bf16.mxu0 0
    %304 = vmatpush1.bf16.msra.mxu0 %v184
    %305 = vmatprep.subr.bf16.mxu0 0
    %306 = vmatpush1.bf16.msra.mxu0 %v187
    %307 = vmatprep.subr.bf16.mxu0 0
    %308 = vmatpush1.bf16.msra.mxu0 %v190
    %309 = vmatprep.subr.bf16.mxu0 0
    %310 = vmatpush1.bf16.msra.mxu0 %v193
    %311 = vmatprep.subr.bf16.mxu0 0
    %312 = vmatpush1.bf16.msra.mxu0 %v196
    %313 = vmatprep.subr.bf16.mxu0 0
    %314 = vmatpush1.bf16.msra.mxu0 %v199
    %315 = vmatprep.subr.bf16.mxu0 0
    %316 = vmatpush1.bf16.msra.mxu0 %v202
    %317 = vmatprep.subr.bf16.mxu0 0
    %318 = vmatpush1.bf16.msra.mxu0 %v205
    %319 = vmatprep.subr.bf16.mxu0 0
    %320 = vmatpush1.bf16.msra.mxu0 0
    %321 = vmatprep.subr.bf16.mxu0 0
    %322 = vmatpush1.bf16.msra.mxu0 0
    %323 = vmatprep.subr.bf16.mxu0 0
    %324 = vmatpush1.bf16.msra.mxu0 0
    %325 = vmatprep.subr.bf16.mxu0 0
    %326 = vmatpush1.bf16.msra.mxu0 0
    %327 = vmatprep.subr.bf16.mxu0 0
    %328 = vmatpush1.bf16.msra.mxu0 0
    %329 = vmatprep.subr.bf16.mxu0 0
    %330 = vmatpush1.bf16.msra.mxu0 0
    %331 = vmatprep.subr.bf16.mxu0 0
    %332 = vmatpush1.bf16.msra.mxu0 0
    %333 = vmatprep.subr.bf16.mxu0 0
    %334 = vmatpush1.bf16.msra.mxu0 0
    %335 = vmatprep.mubr.bf16.mxu0 0
    %336 = vmatmul.mubr.bf16.gmra.mrb[0].mxu0 %v94
    %v337 = vpop.f32.mrb[0].mxu0
    %v338 = vadd.f32 0.0, %v337
    %v339 = vpop.f32.mrb[0].mxu0
    %v340 = vpop.f32.mrb[0].mxu0
    %v341 = vadd.f32 0.0, %v340
    %v342 = vpop.f32.mrb[0].mxu0
    %343 = vmatprep.mubr.bf16.mxu0 0
    %344 = vmatmul.mubr.bf16.gmra.mrb[0].mxu0 %v95
    %v345 = vpop.f32.mrb[0].mxu0
    %v346 = vadd.f32 0.0, %v345
    %v347 = vpop.f32.mrb[0].mxu0
    %v348 = vpop.f32.mrb[0].mxu0
    %v349 = vadd.f32 0.0, %v348
    %v350 = vpop.f32.mrb[0].mxu0
    %351 = vmatprep.mubr.bf16.mxu0 0
    %352 = vmatmul.mubr.bf16.gmra.mrb[0].mxu0 %v96
    %v353 = vpop.f32.mrb[0].mxu0
    %v354 = vadd.f32 0.0, %v353
    %v355 = vpop.f32.mrb[0].mxu0
    %v356 = vpop.f32.mrb[0].mxu0
    %v357 = vadd.f32 0.0, %v356
    %v358 = vpop.f32.mrb[0].mxu0
    %359 = vmatprep.mubr.bf16.mxu0 0
    %360 = vmatmul.mubr.bf16.gmra.mrb[0].mxu0 %v97
    %v361 = vpop.f32.mrb[0].mxu0
    %v362 = vadd.f32 0.0, %v361
    %v363 = vpop.f32.mrb[0].mxu0
    %v364 = vpop.f32.mrb[0].mxu0
    %v365 = vadd.f32 0.0, %v364
    %v366 = vpop.f32.mrb[0].mxu0
    %367 = vdwg.mxu0
    %v368 = vld [vmem:[%s2] sm:$0xff]
    %v369 = vld [vmem:[%s2 + $0x8] sm:$0xff]
    %v370 = vld [vmem:[%s2 + $0x10] sm:$0xff]
    %v371 = vadd.f32 %v265, %v368
    %v372 = vadd.f32 %v267, %v369
    %v373 = vadd.f32 %v338, %v370
    %v374 = vadd.f32 %v269, %v368
    %v375 = vadd.f32 %v271, %v369
    %v376 = vadd.f32 %v341, %v370
    %v377 = vadd.f32 %v275, %v368
    %v378 = vadd.f32 %v277, %v369
    %v379 = vadd.f32 %v346, %v370
    %v380 = vadd.f32 %v279, %v368
    %v381 = vadd.f32 %v281, %v369
    %v382 = vadd.f32 %v349, %v370
    %v383 = vadd.f32 %v285, %v368
    %v384 = vadd.f32 %v287, %v369
    %v385 = vadd.f32 %v354, %v370
    %v386 = vadd.f32 %v289, %v368
    %v387 = vadd.f32 %v291, %v369
    %v388 = vadd.f32 %v357, %v370
    %v389 = vadd.f32 %v295, %v368
    %v390 = vadd.f32 %v297, %v369
    %v391 = vadd.f32 %v362, %v370
    %v392 = vadd.f32 %v299, %v368
    %v393 = vadd.f32 %v301, %v369
    %v394 = vadd.f32 %v365, %v370
    %v395 = vrot.slane %v371, 4
    %v396 = vmax.f32 %v371, %v395
    %v397 = vrot.slane %v396, 2
    %v398 = vmax.f32 %v396, %v397
    %v399 = vrot.slane %v398, 1
    %v400 = vmax.f32 %v398, %v399
    %v401 = vrot.slane %v372, 4
    %v402 = vmax.f32 %v372, %v401
    %v403 = vrot.slane %v402, 2
    %v404 = vmax.f32 %v402, %v403
    %v405 = vrot.slane %v404, 1
    %v406 = vmax.f32 %v404, %v405
    %v407 = vrot.slane %v373, 4
    %v408 = vmax.f32 %v373, %v407
    %v409 = vrot.slane %v408, 2
    %v410 = vmax.f32 %v408, %v409
    %v411 = vrot.slane %v410, 1
    %v412 = vmax.f32 %v410, %v411
    %v413 = vrot.slane %v374, 4
    %v414 = vmax.f32 %v374, %v413
    %v415 = vrot.slane %v414, 2
    %v416 = vmax.f32 %v414, %v415
    %v417 = vrot.slane %v416, 1
    %v418 = vmax.f32 %v416, %v417
    %v419 = vrot.slane %v375, 4
    %v420 = vmax.f32 %v375, %v419
    %v421 = vrot.slane %v420, 2
    %v422 = vmax.f32 %v420, %v421
    %v423 = vrot.slane %v422, 1
    %v424 = vmax.f32 %v422, %v423
    %v425 = vrot.slane %v376, 4
    %v426 = vmax.f32 %v376, %v425
    %v427 = vrot.slane %v426, 2
    %v428 = vmax.f32 %v426, %v427
    %v429 = vrot.slane %v428, 1
    %v430 = vmax.f32 %v428, %v429
    %v431 = vrot.slane %v377, 4
    %v432 = vmax.f32 %v377, %v431
    %v433 = vrot.slane %v432, 2
    %v434 = vmax.f32 %v432, %v433
    %v435 = vrot.slane %v434, 1
    %v436 = vmax.f32 %v434, %v435
    %v437 = vrot.slane %v378, 4
    %v438 = vmax.f32 %v378, %v437
    %v439 = vrot.slane %v438, 2
    %v440 = vmax.f32 %v438, %v439
    %v441 = vrot.slane %v440, 1
    %v442 = vmax.f32 %v440, %v441
    %v443 = vrot.slane %v379, 4
    %v444 = vmax.f32 %v379, %v443
    %v445 = vrot.slane %v444, 2
    %v446 = vmax.f32 %v444, %v445
    %v447 = vrot.slane %v446, 1
    %v448 = vmax.f32 %v446, %v447
    %v449 = vrot.slane %v380, 4
    %v450 = vmax.f32 %v380, %v449
    %v451 = vrot.slane %v450, 2
    %v452 = vmax.f32 %v450, %v451
    %v453 = vrot.slane %v452, 1
    %v454 = vmax.f32 %v452, %v453
    %v455 = vrot.slane %v381, 4
    %v456 = vmax.f32 %v381, %v455
    %v457 = vrot.slane %v456, 2
    %v458 = vmax.f32 %v456, %v457
    %v459 = vrot.slane %v458, 1
    %v460 = vmax.f32 %v458, %v459
    %v461 = vrot.slane %v382, 4
    %v462 = vmax.f32 %v382, %v461
    %v463 = vrot.slane %v462, 2
    %v464 = vmax.f32 %v462, %v463
    %v465 = vrot.slane %v464, 1
    %v466 = vmax.f32 %v464, %v465
    %v467 = vrot.slane %v383, 4
    %v468 = vmax.f32 %v383, %v467
    %v469 = vrot.slane %v468, 2
    %v470 = vmax.f32 %v468, %v469
    %v471 = vrot.slane %v470, 1
    %v472 = vmax.f32 %v470, %v471
    %v473 = vrot.slane %v384, 4
    %v474 = vmax.f32 %v384, %v473
    %v475 = vrot.slane %v474, 2
    %v476 = vmax.f32 %v474, %v475
    %v477 = vrot.slane %v476, 1
    %v478 = vmax.f32 %v476, %v477
    %v479 = vrot.slane %v385, 4
    %v480 = vmax.f32 %v385, %v479
    %v481 = vrot.slane %v480, 2
    %v482 = vmax.f32 %v480, %v481
    %v483 = vrot.slane %v482, 1
    %v484 = vmax.f32 %v482, %v483
    %v485 = vrot.slane %v386, 4
    %v486 = vmax.f32 %v386, %v485
    %v487 = vrot.slane %v486, 2
    %v488 = vmax.f32 %v486, %v487
    %v489 = vrot.slane %v488, 1
    %v490 = vmax.f32 %v488, %v489
    %v491 = vrot.slane %v387, 4
    %v492 = vmax.f32 %v387, %v491
    %v493 = vrot.slane %v492, 2
    %v494 = vmax.f32 %v492, %v493
    %v495 = vrot.slane %v494, 1
    %v496 = vmax.f32 %v494, %v495
    %v497 = vrot.slane %v388, 4
    %v498 = vmax.f32 %v388, %v497
    %v499 = vrot.slane %v498, 2
    %v500 = vmax.f32 %v498, %v499
    %v501 = vrot.slane %v500, 1
    %v502 = vmax.f32 %v500, %v501
    %v503 = vrot.slane %v389, 4
    %v504 = vmax.f32 %v389, %v503
    %v505 = vrot.slane %v504, 2
    %v506 = vmax.f32 %v504, %v505
    %v507 = vrot.slane %v506, 1
    %v508 = vmax.f32 %v506, %v507
    %v509 = vrot.slane %v390, 4
    %v510 = vmax.f32 %v390, %v509
    %v511 = vrot.slane %v510, 2
    %v512 = vmax.f32 %v510, %v511
    %v513 = vrot.slane %v512, 1
    %v514 = vmax.f32 %v512, %v513
    %v515 = vrot.slane %v391, 4
    %v516 = vmax.f32 %v391, %v515
    %v517 = vrot.slane %v516, 2
    %v518 = vmax.f32 %v516, %v517
    %v519 = vrot.slane %v518, 1
    %v520 = vmax.f32 %v518, %v519
    %v521 = vrot.slane %v392, 4
    %v522 = vmax.f32 %v392, %v521
    %v523 = vrot.slane %v522, 2
    %v524 = vmax.f32 %v522, %v523
    %v525 = vrot.slane %v524, 1
    %v526 = vmax.f32 %v524, %v525
    %v527 = vrot.slane %v393, 4
    %v528 = vmax.f32 %v393, %v527
    %v529 = vrot.slane %v528, 2
    %v530 = vmax.f32 %v528, %v529
    %v531 = vrot.slane %v530, 1
    %v532 = vmax.f32 %v530, %v531
    %v533 = vrot.slane %v394, 4
    %v534 = vmax.f32 %v394, %v533
    %v535 = vrot.slane %v534, 2
    %v536 = vmax.f32 %v534, %v535
    %v537 = vrot.slane %v536, 1
    %v538 = vmax.f32 %v536, %v537
    %v539 = vld [vmem:[%s3] sm:$0x7]
    %v541 = vlaneseq
    %v542 = vshrl.u32 %v541, 7
    %v543 = vsub.s32 0, %v542
    %v544 = vrot.slane %v539, %v543
    %v545 = vlaneseq
    %v546 = vshrl.u32 %v545, 7
    %v547 = vsub.s32 1, %v546
    %v548 = vrot.slane %v539, %v547
    %v549 = vlaneseq
    %v550 = vshrl.u32 %v549, 7
    %v551 = vsub.s32 2, %v550
    %v552 = vrot.slane %v539, %v551
    %v556 = vadd.f32 %v400, %v544
    %v557 = vadd.f32 %v406, %v548
    %v558 = vadd.f32 %v412, %v552
    %v559 = vadd.f32 %v418, %v544
    %v560 = vadd.f32 %v424, %v548
    %v561 = vadd.f32 %v430, %v552
    %v562 = vadd.f32 %v436, %v544
    %v563 = vadd.f32 %v442, %v548
    %v564 = vadd.f32 %v448, %v552
    %v565 = vadd.f32 %v454, %v544
    %v566 = vadd.f32 %v460, %v548
    %v567 = vadd.f32 %v466, %v552
    %v568 = vadd.f32 %v472, %v544
    %v569 = vadd.f32 %v478, %v548
    %v570 = vadd.f32 %v484, %v552
    %v571 = vadd.f32 %v490, %v544
    %v572 = vadd.f32 %v496, %v548
    %v573 = vadd.f32 %v502, %v552
    %v574 = vadd.f32 %v508, %v544
    %v575 = vadd.f32 %v514, %v548
    %v576 = vadd.f32 %v520, %v552
    %v577 = vadd.f32 %v526, %v544
    %v578 = vadd.f32 %v532, %v548
    %v579 = vadd.f32 %v538, %v552
    %v580 = vmax.f32 %v556, 0.0
    %v581 = vmax.f32 %v557, 0.0
    %v582 = vmax.f32 %v558, 0.0
    %v583 = vmax.f32 %v559, 0.0
    %v584 = vmax.f32 %v560, 0.0
    %v585 = vmax.f32 %v561, 0.0
    %v586 = vmax.f32 %v562, 0.0
    %v587 = vmax.f32 %v563, 0.0
    %v588 = vmax.f32 %v564, 0.0
    %v589 = vmax.f32 %v565, 0.0
    %v590 = vmax.f32 %v566, 0.0
    %v591 = vmax.f32 %v567, 0.0
    %v592 = vmax.f32 %v568, 0.0
    %v593 = vmax.f32 %v569, 0.0
    %v594 = vmax.f32 %v570, 0.0
    %v595 = vmax.f32 %v571, 0.0
    %v596 = vmax.f32 %v572, 0.0
    %v597 = vmax.f32 %v573, 0.0
    %v598 = vmax.f32 %v574, 0.0
    %v599 = vmax.f32 %v575, 0.0
    %v600 = vmax.f32 %v576, 0.0
    %v601 = vmax.f32 %v577, 0.0
    %v602 = vmax.f32 %v578, 0.0
    %v603 = vmax.f32 %v579, 0.0
    %v604 = vld [vmem:[#allocation2] sm:$0xff]
    %v605 = vld [vmem:[#allocation2 + $0x8] sm:$0xff]
    %v606 = vld [vmem:[#allocation2 + $0x10] sm:$0xff]
    %v607 = vld [vmem:[#allocation2 + $0x18] sm:$0xff]
    %v608 = vld [vmem:[#allocation2 + $0x20] sm:$0xff]
    %v609 = vld [vmem:[#allocation2 + $0x28] sm:$0xff]
    %v610 = vld [vmem:[#allocation2 + $0x30] sm:$0xff]
    %v611 = vld [vmem:[#allocation2 + $0x38] sm:$0xff]
    %v612 = vld [vmem:[#allocation2 + $0x40] sm:$0xff]
    %v613 = vld [vmem:[#allocation2 + $0x48] sm:$0xff]
    %v614 = vld [vmem:[#allocation2 + $0x50] sm:$0xff]
    %v615 = vld [vmem:[#allocation2 + $0x58] sm:$0xff]
    %v616 = vld [vmem:[#allocation2 + $0x60] sm:$0xff]
    %v617 = vld [vmem:[#allocation2 + $0x68] sm:$0xff]
    %v618 = vld [vmem:[#allocation2 + $0x70] sm:$0xff]
    %v619 = vld [vmem:[#allocation2 + $0x78] sm:$0xff]
    %v620 = vld [vmem:[#allocation2 + $0x80] sm:$0xff]
    %v621 = vld [vmem:[#allocation2 + $0x88] sm:$0xff]
    %v622 = vld [vmem:[#allocation2 + $0x90] sm:$0xff]
    %v623 = vld [vmem:[#allocation2 + $0x98] sm:$0xff]
    %v624 = vld [vmem:[#allocation2 + $0xa0] sm:$0xff]
    %v625 = vld [vmem:[#allocation2 + $0xa8] sm:$0xff]
    %v626 = vld [vmem:[#allocation2 + $0xb0] sm:$0xff]
    %v627 = vld [vmem:[#allocation2 + $0xb8] sm:$0xff]
    %v628 = vld [vmem:[#allocation2 + $0xc0] sm:$0xff]
    %v629 = vld [vmem:[#allocation2 + $0xc8] sm:$0xff]
    %v630 = vld [vmem:[#allocation2 + $0xd0] sm:$0xff]
    %v631 = vld [vmem:[#allocation2 + $0xd8] sm:$0xff]
    %v632 = vld [vmem:[#allocation2 + $0xe0] sm:$0xff]
    %v633 = vld [vmem:[#allocation2 + $0xe8] sm:$0xff]
    %v634 = vld [vmem:[#allocation2 + $0xf0] sm:$0xff]
    %v635 = vld [vmem:[#allocation2 + $0xf8] sm:$0xff]
    %v636 = vld [vmem:[#allocation2 + $0x100] sm:$0xff]
    %v637 = vld [vmem:[#allocation2 + $0x108] sm:$0xff]
    %v638 = vld [vmem:[#allocation2 + $0x110] sm:$0xff]
    %v639 = vld [vmem:[#allocation2 + $0x118] sm:$0xff]
    %v640 = vld [vmem:[#allocation2 + $0x120] sm:$0xff]
    %v641 = vld [vmem:[#allocation2 + $0x128] sm:$0xff]
    %v642 = vld [vmem:[#allocation2 + $0x130] sm:$0xff]
    %v643 = vld [vmem:[#allocation2 + $0x138] sm:$0xff]
    %v644 = vld [vmem:[#allocation2 + $0x140] sm:$0xff]
    %v645 = vld [vmem:[#allocation2 + $0x148] sm:$0xff]
    %v646 = vld [vmem:[#allocation2 + $0x150] sm:$0xff]
    %v647 = vld [vmem:[#allocation2 + $0x158] sm:$0xff]
    %v648 = vld [vmem:[#allocation2 + $0x160] sm:$0xff]
    %v649 = vld [vmem:[#allocation2 + $0x168] sm:$0xff]
    %v650 = vld [vmem:[#allocation2 + $0x170] sm:$0xff]
    %v651 = vld [vmem:[#allocation2 + $0x178] sm:$0xff]
    %v652 = vld [vmem:[%s5] sm:$0x1]
    %v654 = vlaneseq
    %v655 = vshrl.u32 %v654, 7
    %v656 = vsub.s32 0, %v655
    %v657 = vrot.slane %v652, %v656
    %v683 = vrot.slane %v583, 7
    %vm684 = vcmask 1041409
    %v685 = vsel %vm684, %v683, %v580
    %v686 = vrot.slane %v586, 6
    %vm687 = vcmask 1042434
    %v688 = vsel %vm687, %v686, %v685
    %v689 = vrot.slane %v589, 5
    %vm690 = vcmask 1043459
    %v691 = vsel %vm690, %v689, %v688
    %v692 = vrot.slane %v592, 4
    %vm693 = vcmask 1044484
    %v694 = vsel %vm693, %v692, %v691
    %v695 = vrot.slane %v595, 3
    %vm696 = vcmask 1045509
    %v697 = vsel %vm696, %v695, %v694
    %v698 = vrot.slane %v598, 2
    %vm699 = vcmask 1046534
    %v700 = vsel %vm699, %v698, %v697
    %v701 = vrot.slane %v601, 1
    %vm702 = vcmask 1047559
    %v703 = vsel %vm702, %v701, %v700
    %v704 = vrot.slane %v584, 7
    %v705 = vsel %vm684, %v704, %v581
    %v706 = vrot.slane %v587, 6
    %v707 = vsel %vm687, %v706, %v705
    %v708 = vrot.slane %v590, 5
    %v709 = vsel %vm690, %v708, %v707
    %v710 = vrot.slane %v593, 4
    %v711 = vsel %vm693, %v710, %v709
    %v712 = vrot.slane %v596, 3
    %v713 = vsel %vm696, %v712, %v711
    %v714 = vrot.slane %v599, 2
    %v715 = vsel %vm699, %v714, %v713
    %v716 = vrot.slane %v602, 1
    %v717 = vsel %vm702, %v716, %v715
    %v718 = vrot.slane %v585, 7
    %v719 = vsel %vm684, %v718, %v582
    %v720 = vrot.slane %v588, 6
    %v721 = vsel %vm687, %v720, %v719
    %v722 = vrot.slane %v591, 5
    %v723 = vsel %vm690, %v722, %v721
    %v724 = vrot.slane %v594, 4
    %v725 = vsel %vm693, %v724, %v723
    %v726 = vrot.slane %v597, 3
    %v727 = vsel %vm696, %v726, %v725
    %v728 = vrot.slane %v600, 2
    %v729 = vsel %vm699, %v728, %v727
    %v730 = vrot.slane %v603, 1
    %v731 = vsel %vm702, %v730, %v729
    %735 = vmatprep.subr.mxu0 0.0
    %736 = vmatpush1.msra.mxu0 %v604
    %737 = vmatprep.subr.mxu0 0.0
    %738 = vmatpush1.msra.mxu0 %v605
    %739 = vmatprep.subr.mxu0 0.0
    %740 = vmatpush1.msra.mxu0 %v606
    %741 = vmatprep.subr.mxu0 0.0
    %742 = vmatpush1.msra.mxu0 %v607
    %743 = vmatprep.subr.mxu0 0.0
    %744 = vmatpush1.msra.mxu0 %v608
    %745 = vmatprep.subr.mxu0 0.0
    %746 = vmatpush1.msra.mxu0 %v609
    %747 = vmatprep.subr.mxu0 0.0
    %748 = vmatpush1.msra.mxu0 %v610
    %749 = vmatprep.subr.mxu0 0.0
    %750 = vmatpush1.msra.mxu0 %v611
    %751 = vmatprep.subr.mxu0 0.0
    %752 = vmatpush1.msra.mxu0 %v612
    %753 = vmatprep.subr.mxu0 0.0
    %754 = vmatpush1.msra.mxu0 %v613
    %755 = vmatprep.subr.mxu0 0.0
    %756 = vmatpush1.msra.mxu0 %v614
    %757 = vmatprep.subr.mxu0 0.0
    %758 = vmatpush1.msra.mxu0 %v615
    %759 = vmatprep.subr.mxu0 0.0
    %760 = vmatpush1.msra.mxu0 %v616
    %761 = vmatprep.subr.mxu0 0.0
    %762 = vmatpush1.msra.mxu0 %v617
    %763 = vmatprep.subr.mxu0 0.0
    %764 = vmatpush1.msra.mxu0 %v618
    %765 = vmatprep.subr.mxu0 0.0
    %766 = vmatpush1.msra.mxu0 %v619
    %767 = vmatprep.subr.mxu0 0.0
    %768 = vmatpush1.msra.mxu0 %v620
    %769 = vmatprep.subr.mxu0 0.0
    %770 = vmatpush1.msra.mxu0 %v621
    %771 = vmatprep.subr.mxu0 0.0
    %772 = vmatpush1.msra.mxu0 %v622
    %773 = vmatprep.subr.mxu0 0.0
    %774 = vmatpush1.msra.mxu0 %v623
    %775 = vmatprep.subr.mxu0 0.0
    %776 = vmatpush1.msra.mxu0 %v624
    %777 = vmatprep.subr.mxu0 0.0
    %778 = vmatpush1.msra.mxu0 %v625
    %779 = vmatprep.subr.mxu0 0.0
    %780 = vmatpush1.msra.mxu0 %v626
    %781 = vmatprep.subr.mxu0 0.0
    %782 = vmatpush1.msra.mxu0 %v627
    %783 = vmatprep.subr.mxu0 0.0
    %784 = vmatpush1.msra.mxu0 %v628
    %785 = vmatprep.subr.mxu0 0.0
    %786 = vmatpush1.msra.mxu0 %v629
    %787 = vmatprep.subr.mxu0 0.0
    %788 = vmatpush1.msra.mxu0 %v630
    %789 = vmatprep.subr.mxu0 0.0
    %790 = vmatpush1.msra.mxu0 %v631
    %791 = vmatprep.subr.mxu0 0.0
    %792 = vmatpush1.msra.mxu0 %v632
    %793 = vmatprep.subr.mxu0 0.0
    %794 = vmatpush1.msra.mxu0 %v633
    %795 = vmatprep.subr.mxu0 0.0
    %796 = vmatpush1.msra.mxu0 %v634
    %797 = vmatprep.subr.mxu0 0.0
    %798 = vmatpush1.msra.mxu0 %v635
    %799 = vmatprep.mubr.f32.mxu0 %v717
    %800 = vmatmul.mubr.f32.gmra.mrb[0].mxu0 %v703
    %v801 = vpop.f32.mrb[0].mxu0
    %v802 = vadd.f32 %v657, %v801
    %v803 = vpop.f32.mrb[0].mxu0
    %804 = vdwg.mxu0
    %805 = vmatprep.subr.mxu0 0.0
    %806 = vmatpush1.msra.mxu0 %v636
    %807 = vmatprep.subr.mxu0 0.0
    %808 = vmatpush1.msra.mxu0 %v637
    %809 = vmatprep.subr.mxu0 0.0
    %810 = vmatpush1.msra.mxu0 %v638
    %811 = vmatprep.subr.mxu0 0.0
    %812 = vmatpush1.msra.mxu0 %v639
    %813 = vmatprep.subr.mxu0 0.0
    %814 = vmatpush1.msra.mxu0 %v640
    %815 = vmatprep.subr.mxu0 0.0
    %816 = vmatpush1.msra.mxu0 %v641
    %817 = vmatprep.subr.mxu0 0.0
    %818 = vmatpush1.msra.mxu0 %v642
    %819 = vmatprep.subr.mxu0 0.0
    %820 = vmatpush1.msra.mxu0 %v643
    %821 = vmatprep.subr.mxu0 0.0
    %822 = vmatpush1.msra.mxu0 %v644
    %823 = vmatprep.subr.mxu0 0.0
    %824 = vmatpush1.msra.mxu0 %v645
    %825 = vmatprep.subr.mxu0 0.0
    %826 = vmatpush1.msra.mxu0 %v646
    %827 = vmatprep.subr.mxu0 0.0
    %828 = vmatpush1.msra.mxu0 %v647
    %829 = vmatprep.subr.mxu0 0.0
    %830 = vmatpush1.msra.mxu0 %v648
    %831 = vmatprep.subr.mxu0 0.0
    %832 = vmatpush1.msra.mxu0 %v649
    %833 = vmatprep.subr.mxu0 0.0
    %834 = vmatpush1.msra.mxu0 %v650
    %835 = vmatprep.subr.mxu0 0.0
    %836 = vmatpush1.msra.mxu0 %v651
    %837 = vmatprep.subr.mxu0 0.0
    %838 = vmatpush1.msra.mxu0 0.0
    %839 = vmatprep.subr.mxu0 0.0
    %840 = vmatpush1.msra.mxu0 0.0
    %841 = vmatprep.subr.mxu0 0.0
    %842 = vmatpush1.msra.mxu0 0.0
    %843 = vmatprep.subr.mxu0 0.0
    %844 = vmatpush1.msra.mxu0 0.0
    %845 = vmatprep.subr.mxu0 0.0
    %846 = vmatpush1.msra.mxu0 0.0
    %847 = vmatprep.subr.mxu0 0.0
    %848 = vmatpush1.msra.mxu0 0.0
    %849 = vmatprep.subr.mxu0 0.0
    %850 = vmatpush1.msra.mxu0 0.0
    %851 = vmatprep.subr.mxu0 0.0
    %852 = vmatpush1.msra.mxu0 0.0
    %853 = vmatprep.subr.mxu0 0.0
    %854 = vmatpush1.msra.mxu0 0.0
    %855 = vmatprep.subr.mxu0 0.0
    %856 = vmatpush1.msra.mxu0 0.0
    %857 = vmatprep.subr.mxu0 0.0
    %858 = vmatpush1.msra.mxu0 0.0
    %859 = vmatprep.subr.mxu0 0.0
    %860 = vmatpush1.msra.mxu0 0.0
    %861 = vmatprep.subr.mxu0 0.0
    %862 = vmatpush1.msra.mxu0 0.0
    %863 = vmatprep.subr.mxu0 0.0
    %864 = vmatpush1.msra.mxu0 0.0
    %865 = vmatprep.subr.mxu0 0.0
    %866 = vmatpush1.msra.mxu0 0.0
    %867 = vmatprep.subr.mxu0 0.0
    %868 = vmatpush1.msra.mxu0 0.0
    %869 = vmatprep.mubr.f32.mxu0 0.0
    %870 = vmatmul.mubr.f32.gmra.mrb[0].mxu0 %v731
    %v871 = vpop.f32.mrb[0].mxu0
    %v872 = vadd.f32 %v802, %v871
    %v873 = vpop.f32.mrb[0].mxu0
    %874 = vdwg.mxu0
    %875 = vst [vmem:[%s6] sm:$0xff] %v872
    // Predicated region
    $region30: #{textcnn_forward.1} parent=1 // pred_check
      _
    $region31: #{textcnn_forward.1} parent=1 // pred_check_branch
      %877 = sbr.rel (0) target = $region33
    $region32: #{textcnn_forward.1} parent=1 // pred_region
      _
    $region33: #{textcnn_forward.1} parent=1 // pred_fallthru
      _
    // Predicated region
    $region34: #{textcnn_forward.1} parent=1 // pred_check
      _
    $region35: #{textcnn_forward.1} parent=1 // pred_check_branch
      %879 = sbr.rel (0) target = $region37
    $region36: #{textcnn_forward.1} parent=1 // pred_region
      _
    $region37: #{textcnn_forward.1} parent=1 // pred_fallthru
      _
    %880 = vsyncpa [#allocation3], 1

</llo_original>
